<compile_context>
chip_gen: v7x
topology: tpu7x:2x2x1
jax: 0.10.0
libtpu: 0.0.40
codegen_flags: <defaults>
</compile_context>

<pallas_src>
import jax
import jax.numpy as jnp
from jax.experimental import pallas as pl
from jax.experimental.pallas import tpu as pltpu


def _mv_sigmoid_kernel(a_ref, x_ref, o_ref):
    a = a_ref[...].astype(jnp.float32)            # (tile_n, D) rows of A
    w = x_ref[...].astype(jnp.float32)            # (1, D) lane-dense parameter row
    # Per-row dot product: VPU multiply + XLU reduce over the lane (D) axis,
    # accumulated in f32.
    y = jnp.sum(a * w, axis=-1, keepdims=True)    # (tile_n, 1)
    o_ref[...] = jax.nn.sigmoid(y).astype(o_ref.dtype)


def _round_up(v, m):
    return -(-v // m) * m


def _sublane_multiple(itemsize):
    # Minimum second-minor tile: 8 (f32/i32), 16 (bf16/f16), 32 (int8/fp8).
    return max(8, 32 // max(int(itemsize), 1))


def _num_tensorcores():
    """TensorCores per chip (2 on v7x, else 1).  Fully defensive; defaults to 1."""
    try:
        info = pltpu.get_tpu_info()
        for attr in ("num_cores", "core_count", "num_tensorcores", "tensorcore_count"):
            v = getattr(info, attr, None)
            if isinstance(v, int) and v > 0:
                return v
    except Exception:
        pass
    try:
        if "v7" in jax.devices()[0].device_kind.lower():
            return 2
    except Exception:
        pass
    return 1


def _pick_tile_n(n, d, itemsize, num_cores):
    """Rows of A per grid step (multiple of 128 where N allows)."""
    lane = 128
    sm = _sublane_multiple(itemsize)
    stream_row_bytes = max(d * itemsize, 1)        # HBM bytes DMA'd per row
    vmem_row_bytes = max(d * 4, 1)                 # f32 upcast footprint per row

    target_rows = (8 << 20) // stream_row_bytes    # ~8 MiB of A per step
    cap_rows = (8 << 20) // vmem_row_bytes         # double-buffer + f32 temps stay well under 48 MiB
    t = max(lane, (max(min(target_rows, cap_rows), lane) // lane) * lane)

    n_ceil = _round_up(n, sm)
    if n_ceil <= lane:
        return min(t, n_ceil)                      # tiny batch: single small block
    t = min(t, _round_up(n_ceil, lane))

    if num_cores >= 2:
        # v7x: prefer ~2 steps per TensorCore, but keep blocks >= ~2 MiB.
        min_rows = max(lane, (((2 << 20) // stream_row_bytes) // lane) * lane)
        split = max(lane, ((n_ceil // (2 * num_cores)) // lane) * lane)
        t = min(t, max(split, min(min_rows, t)))
    return t


def binary_classifier_forward(A, x, *, tile_n=None, stream_dtype=None):
    """sigmoid(A @ x) — equivalent to BinaryClassifier.forward(A)."""
    N, D = A.shape
    assert x.shape == (D,)

    if stream_dtype is not None:                   # optional bf16 HBM-traffic halving
        A = A.astype(stream_dtype)
    x_row = x.reshape(1, D).astype(A.dtype)        # lane-dense parameter row
    itemsize = jnp.dtype(A.dtype).itemsize

    num_cores = _num_tensorcores()
    if tile_n is None:
        tile_n = _pick_tile_n(N, D, itemsize, num_cores)
    sm = _sublane_multiple(itemsize)
    assert tile_n > 0 and (tile_n % sm == 0 or tile_n == N)

    num_tiles = pl.cdiv(N, tile_n)

    out = pl.pallas_call(
        _mv_sigmoid_kernel,
        out_shape=jax.ShapeDtypeStruct((N, 1), jnp.float32),
        grid_spec=pltpu.PrefetchScalarGridSpec(
            num_scalar_prefetch=0,
            grid=(num_tiles,),
            in_specs=[
                # Row tiles of A, double-buffered by the Pallas pipeline; the
                # last block is clipped to the array bounds (no wrapper padding).
                pl.BlockSpec((tile_n, D), lambda i: (i, 0)),
                # x: constant block index -> fetched once, stays resident.
                pl.BlockSpec((1, D), lambda i: (0, 0)),
            ],
            out_specs=pl.BlockSpec((tile_n, 1), lambda i: (i, 0)),
        ),
        compiler_params=pltpu.CompilerParams(
            dimension_semantics=("parallel",),      # shard row tiles across TCs (v7x)
            vmem_limit_bytes=48 * 1024 * 1024,      # room for ~8 MiB double-buffered A blocks
        ),
    )(A, x_row)

    return out.reshape(N)


if __name__ == "__main__":
    key = jax.random.PRNGKey(0)
    k_a, k_x, k_a2 = jax.random.split(key, 3)

    # Small shapes consistent with the module: N batch rows, input_dim D.
    N, D = 8, 32
    A = jax.random.normal(k_a, (N, D), dtype=jnp.float32)
    # nn.Parameter(torch.zeros(input_dim)) would give all-0.5 outputs; use
    # deterministic random values so the kernel path is actually exercised.
    x = jax.random.normal(k_x, (D,), dtype=jnp.float32)

    out = jax.block_until_ready(binary_classifier_forward(A, x))
    ref = jax.nn.sigmoid(A @ x)
    assert out.shape == (N,)
    assert out.dtype == jnp.float32
    assert jnp.allclose(out, ref, atol=1e-5, rtol=1e-5)

    # Ragged-tail path: N not a multiple of tile_n, no wrapper-side padding copy;
    # the clipped last block's dead rows are never written back.
    N2, D2 = 300, 256
    A2 = jax.random.normal(k_a2, (N2, D2), dtype=jnp.float32)
    x2 = jax.random.normal(k_x, (D2,), dtype=jnp.float32)
    out2 = jax.block_until_ready(binary_classifier_forward(A2, x2, tile_n=128))
    ref2 = jax.nn.sigmoid(A2 @ x2)
    assert out2.shape == (N2,)
    assert jnp.allclose(out2, ref2, atol=1e-5, rtol=1e-5)

    print("KERNEL_OK")
</pallas_src>

<mosaic_0001>
module attributes {stable_mosaic.version = 11 : i64} {
  func.func @_mv_sigmoid_kernel(%arg0: i32, %arg1: memref<8x32xf32, #tpu.memory_space<vmem>>, %arg2: memref<1x32xf32, #tpu.memory_space<vmem>>, %arg3: memref<8x1xf32, #tpu.memory_space<vmem>>) attributes {dimension_semantics = [#tpu.dimension_semantics<parallel>], iteration_bounds = array<i64: 1>, scalar_prefetch = 0 : i64, scratch_operands = 0 : i64, tpu.core_type = #tpu.core_type<tc>, window_params = [{transform_indices = @transform_0, window_bounds = array<i64: 8, 32>}, {pipeline_mode = #tpu.pipeline_mode<synchronous>, transform_indices = @transform_1, window_bounds = array<i64: 1, 32>}, {transform_indices = @transform_2, window_bounds = array<i64: 8, 1>}]} {
    %c0 = arith.constant 0 : index
    %c0_0 = arith.constant 0 : index
    %0 = vector.load %arg1[%c0, %c0_0] : memref<8x32xf32, #tpu.memory_space<vmem>>, vector<8x32xf32>
    %c0_1 = arith.constant 0 : index
    %c0_2 = arith.constant 0 : index
    %1 = vector.load %arg2[%c0_1, %c0_2] : memref<1x32xf32, #tpu.memory_space<vmem>>, vector<1x32xf32>
    %2 = vector.broadcast %1 : vector<1x32xf32> to vector<8x32xf32>
    %3 = arith.mulf %0, %2 : vector<8x32xf32>
    %cst = arith.constant dense<0.000000e+00> : vector<8xf32>
    %4 = vector.multi_reduction <add>, %3, %cst [1] : vector<8x32xf32> to vector<8xf32>
    %5 = vector.shape_cast %4 : vector<8xf32> to vector<8x1xf32>
    %6 = arith.negf %5 : vector<8x1xf32>
    %7 = math.exp %6 : vector<8x1xf32>
    %cst_3 = arith.constant 1.000000e+00 : f32
    %8 = vector.broadcast %cst_3 : f32 to vector<8x1xf32>
    %9 = arith.addf %8, %7 : vector<8x1xf32>
    %10 = arith.divf %8, %9 : vector<8x1xf32>
    %c0_4 = arith.constant 0 : index
    %c0_5 = arith.constant 0 : index
    %11 = vector.load %arg3[%c0_4, %c0_5] : memref<8x1xf32, #tpu.memory_space<vmem>>, vector<8x1xf32>
    tpu.vector_store %arg3[%c0_4, %c0_5], %10 {strides = array<i32>} : memref<8x1xf32, #tpu.memory_space<vmem>>, vector<8x1xf32>,
    return
  }
  func.func @transform_0(%arg0: i32) -> (i32, i32) {
    %c0_i32 = arith.constant 0 : i32
    %c0_i32_0 = arith.constant 0 : i32
    return %arg0, %c0_i32 : i32, i32
  }
  func.func @transform_1(%arg0: i32) -> (i32, i32) {
    %c0_i32 = arith.constant 0 : i32
    %c0_i32_0 = arith.constant 0 : i32
    %c0_i32_1 = arith.constant 0 : i32
    return %c0_i32, %c0_i32_0 : i32, i32
  }
  func.func @transform_2(%arg0: i32) -> (i32, i32) {
    %c0_i32 = arith.constant 0 : i32
    %c0_i32_0 = arith.constant 0 : i32
    return %arg0, %c0_i32 : i32, i32
  }
}

</mosaic_0001>

<llo_original>
// kernel: tpu_custom_call.1
$region0: #{tpu_custom_call.1}
  #allocation0 [shape = 'u32[]', space=smem, size = 0x4, offset = 0x4, fixed_abs, tag = 'smem constant byte address 0x4 - core index']
  #allocation1 [shape = 'u32[144,128]{1,0:T(1,128)}', space=vmem, size = 0x12000, scoped, tag = 'internal scratch']
  %s0 = inlined_call_operand.hbm [shape: f32[8,32], index: 0, kind: input, shape index: {}]
  %s1 = inlined_call_operand.vmem [shape: f32[1,32], index: 1, kind: input, shape index: {}]
  %s2 = inlined_call_operand.vmem [shape: f32[8,1], index: 2, kind: output, shape index: {}]
  %s3 = sld [smem:[#allocation0]]
  $region22: #{tpu_custom_call.1} parent=0
    _
  %s5 = ssub.s32 1, %s3
  %s6 = scalar_select 0, %s5, %s3
  $region1: #{tpu_custom_call.1} parent=0
    #allocation2 [shape = 'u8[4096]{0}', space=vmem, size = 0x1000, scoped, tag = 'input window, operand 0, single buffered']
    #allocation3 [shape = 's32[1]{0}', space=sflag, size = 0x4, scoped, tag = 'scoped memory for tpu_custom_call.1']
    %7 = vsyncpa [#allocation3], 0
    // Predicated region
    $region2: #{tpu_custom_call.1} parent=1 // pred_check
      _
    $region3: #{tpu_custom_call.1} parent=1 // pred_check_branch
      %9 = sbr.rel (0) target = $region5
    $region4: #{tpu_custom_call.1} parent=1 // pred_region
      %s11 = ssub.s32 128, 128
      %12 = vsyncadd [#allocation3], %s11
      %s14 = sshll.u32 [#allocation2], 4
      %s15 = int_to_ptr.vmem [resolvable:$true] %s14
      %17 = dma.hbm_to_vmem [thread:$0]  %s0, 128, %s15, [#allocation3]
    $region5: #{tpu_custom_call.1} parent=1 // pred_fallthru
      _
    // Predicated region
    $region6: #{tpu_custom_call.1} parent=1 // pred_check
      _
    $region7: #{tpu_custom_call.1} parent=1 // pred_check_branch
      %19 = sbr.rel (0) target = $region9
    $region8: #{tpu_custom_call.1} parent=1 // pred_region
      _
    $region9: #{tpu_custom_call.1} parent=1 // pred_fallthru
      _
    // Predicated region
    $region10: #{tpu_custom_call.1} parent=1 // pred_check
      _
    $region11: #{tpu_custom_call.1} parent=1 // pred_check_branch
      %21 = sbr.rel (0) target = $region13
    $region12: #{tpu_custom_call.1} parent=1 // pred_region
      %22 = dma.done [#allocation3], 128
    $region13: #{tpu_custom_call.1} parent=1 // pred_fallthru
      _
    %v23 = vld [vmem:[#allocation2] sm:$0xff]
    %v24 = vld [vmem:[%s1] sm:$0x1]
    %v26 = vlaneseq
    %v27 = vshrl.u32 %v26, 7
    %v28 = vsub.s32 0, %v27
    %v29 = vrot.slane %v24, %v28
    %v31 = vmul.f32 %v23, %v29
    %vm32 = vcmask 261120
    %v33 = vsel %vm32, %v31, 0.0
    %34 = vadd.xlane.f32.xlu0 %v33
    %v35 = vpop.xlane.xlu0 %34
    %v36 = vxor.u32 %v35, 2147483648
    %v37 = vmul.f32 %v36, 1.442695
    %v38 = vpow.pop %v37
    %v39 = vadd.f32 %v38, 1.0
    %v40 = vrcp.pop %v39
    %v41 = vmul.f32 1.0, %v40
    %vm42 = vcmask 7168
    %43 = vst.msk [vmem:[%s2] sm:$0xff] %vm42, %v41
    // Predicated region
    $region14: #{tpu_custom_call.1} parent=1 // pred_check
      _
    $region15: #{tpu_custom_call.1} parent=1 // pred_check_branch
      %45 = sbr.rel (0) target = $region17
    $region16: #{tpu_custom_call.1} parent=1 // pred_region
      _
    $region17: #{tpu_custom_call.1} parent=1 // pred_fallthru
      _
    // Predicated region
    $region18: #{tpu_custom_call.1} parent=1 // pred_check
      _
    $region19: #{tpu_custom_call.1} parent=1 // pred_check_branch
      %47 = sbr.rel (0) target = $region21
    $region20: #{tpu_custom_call.1} parent=1 // pred_region
      _
    $region21: #{tpu_custom_call.1} parent=1 // pred_fallthru
      _
    %48 = vsyncpa [#allocation3], 1

</llo_original>
